<compile_context>
chip_gen: v6e
topology: v6e:2x2x1
jax: 0.10.0
libtpu: 0.0.40
codegen_flags: <defaults>
</compile_context>

<pallas_src>
import jax
import jax.numpy as jnp
from jax.experimental import pallas as pl
from jax.experimental.pallas import tpu as pltpu


def _round_up(x, m):
    return (x + m - 1) // m * m


def _make_kernel(n_rows, bn, fold, c):
    """Kernel over one (bn, width) tile; width = fold * c."""

    def kernel(x_ref, t_ref, o_ref):
        x = x_ref[...]                                               # (bn, width), native dtype

        # Per-row validity: the tail block may read out-of-bounds garbage rows.
        base = pl.program_id(0) * bn
        row = jax.lax.broadcasted_iota(jnp.int32, t_ref.shape, 0) + base     # (bn, fold)
        t = t_ref[...]                                               # (bn, fold) class ids
        if fold > 1:
            # Lane index of the target class for each folded sub-row: s*c + t.
            t = t + jax.lax.broadcasted_iota(jnp.int32, t_ref.shape, 1) * c
        t = jnp.where(row < n_rows, t, -1)                           # invalid rows never match

        lane = jax.lax.broadcasted_iota(jnp.int32, x.shape, 1)       # (bn, width)
        match = lane == t[:, 0:1]
        for s in range(1, fold):                                     # static unroll (fold <= 16)
            match = match | (lane == t[:, s:s + 1])

        # Only gather the selected logits (the "1 -" term is handled in the wrapper).
        contrib = jnp.where(match, x, 0).astype(jnp.float32)         # (bn, width)

        # Per-tile row-sum only (VPU adds + one cheap sublane reduce); the final
        # cross-tile / cross-lane reduce over a few KB is done in the wrapper.
        o_ref[...] = jnp.sum(contrib, axis=0, keepdims=True).reshape(1, 1, -1)

    return kernel


def _choose_fold(n, c):
    """Fold rows into lanes when C is narrow, if it's free (no logits copy)."""
    if c > 64:
        return 1
    fold = min(128 // c, 16)
    if fold < 2 or n % fold != 0:
        return 1
    return fold


def _choose_block_rows(n_rows, width, itemsize):
    # VMEM bytes per row (lane dim pads to a multiple of 128 in VMEM).
    x_row = _round_up(width, 128) * itemsize
    t_row = 128 * 4                              # int32 targets lane-pad to 128
    rows_x = (8 << 20) // x_row                  # ~8 MiB of logits per buffer
    rows_total = (28 << 20) // (2 * (x_row + t_row))   # total in-flight budget
    rows = max(8, min(rows_x, rows_total))
    rows -= rows % 8
    if rows >= n_rows:
        return n_rows                            # single full-extent block
    return max(rows, 8)


def cosine_loss(output, targets, num_classes=None, block_rows=None):
    """Pallas TPU equivalent of CosineLoss.forward for (N, C) logits."""
    n, c = output.shape
    if num_classes is not None:
        assert num_classes == c, "output.shape[1] must equal num_classes"
    itemsize = jnp.dtype(output.dtype).itemsize

    fold = _choose_fold(n, c)
    n_rows = n // fold
    width = fold * c

    # Row-major reshapes are free (no copy); logits stay in their native dtype.
    x = output.reshape(n_rows, width) if fold > 1 else output
    t = targets.astype(jnp.int32).reshape(n_rows, fold)

    bn = _choose_block_rows(n_rows, width, itemsize) if block_rows is None else block_rows
    bn = max(1, min(bn, n_rows))
    num_tiles = pl.cdiv(n_rows, bn)

    # VMEM: double-buffered logits + (lane-padded) targets + output + margin.
    x_blk = bn * _round_up(width, 128) * itemsize
    t_blk = bn * 128 * 4
    o_blk = _round_up(width, 128) * 4
    vmem_limit = 2 * (x_blk + t_blk + o_blk) + (4 << 20)
    vmem_limit = int(max(16 << 20, min(vmem_limit, 48 << 20)))

    partials = pl.pallas_call(
        _make_kernel(n_rows, bn, fold, c),
        out_shape=jax.ShapeDtypeStruct((num_tiles, 1, width), jnp.float32),
        grid=(num_tiles,),
        in_specs=[
            pl.BlockSpec((bn, width), lambda i: (i, 0)),   # logits tile (streamed)
            pl.BlockSpec((bn, fold), lambda i: (i, 0)),    # targets tile
        ],
        out_specs=pl.BlockSpec((1, 1, width), lambda i: (i, 0, 0)),
        compiler_params=pltpu.CompilerParams(
            dimension_semantics=("parallel",),             # tiles independent -> megacore OK
            vmem_limit_bytes=vmem_limit,
        ),
        cost_estimate=pl.CostEstimate(
            flops=3 * n_rows * width,
            transcendentals=0,
            bytes_accessed=n * c * itemsize + n * 4 + num_tiles * width * 4,
        ),
    )(x, t)

    # loss = mean_i(1 - x[i, t_i]) = (N - sum_i x[i, t_i]) / N
    total = jnp.sum(partials)
    return (jnp.float32(n) - total) / jnp.float32(n)


def _reference_cosine_loss(output, targets, num_classes):
    tgt = jax.nn.one_hot(targets, num_classes, dtype=jnp.float32)
    return jnp.mean(jnp.sum(tgt * (1.0 - output.astype(jnp.float32)), axis=1))


if __name__ == "__main__":
    key = jax.random.PRNGKey(0)
    k1, k2, k3, k4 = jax.random.split(key, 4)

    # Case 1: narrow C, N % fold == 0 -> folded lane-dense path, 2-tile grid.
    N1, C1 = 64, 32
    out1 = jax.random.normal(k1, (N1, C1), dtype=jnp.float32)
    tgt1 = jax.random.randint(k2, (N1,), 0, C1, dtype=jnp.int32)
    loss1 = jax.block_until_ready(cosine_loss(out1, tgt1, num_classes=C1, block_rows=8))
    ref1 = _reference_cosine_loss(out1, tgt1, C1)
    assert jnp.allclose(loss1, ref1, atol=1e-5, rtol=1e-5), (loss1, ref1)

    # Case 2: N not divisible by the fold -> unfolded path; multi-tile grid with
    # a partial tail block (exercises the in-kernel row-validity mask, no padding).
    N2, C2 = 22, 32
    out2 = jax.random.normal(k3, (N2, C2), dtype=jnp.float32)
    tgt2 = jax.random.randint(k4, (N2,), 0, C2, dtype=jnp.int32)
    loss2 = jax.block_until_ready(cosine_loss(out2, tgt2, num_classes=C2, block_rows=8))
    ref2 = _reference_cosine_loss(out2, tgt2, C2)
    assert jnp.allclose(loss2, ref2, atol=1e-5, rtol=1e-5), (loss2, ref2)

    # Case 3: wider C (> 64 -> no folding), bf16 storage, partial tail block.
    N3, C3 = 20, 160
    out3 = jax.random.normal(k1, (N3, C3), dtype=jnp.float32).astype(jnp.bfloat16)
    tgt3 = jax.random.randint(k2, (N3,), 0, C3, dtype=jnp.int32)
    loss3 = jax.block_until_ready(cosine_loss(out3, tgt3, num_classes=C3, block_rows=16))
    ref3 = _reference_cosine_loss(out3, tgt3, C3)
    assert jnp.allclose(loss3, ref3, atol=1e-2, rtol=1e-2), (loss3, ref3)

    # Default (auto block size) path, single full-extent block.
    loss4 = jax.block_until_ready(cosine_loss(out2, tgt2, num_classes=C2))
    assert jnp.allclose(loss4, ref2, atol=1e-5, rtol=1e-5), (loss4, ref2)

    print("KERNEL_OK")
</pallas_src>

<mosaic_0001>
module attributes {stable_mosaic.version = 11 : i64} {
  func.func @kernel(%arg0: i32, %arg1: memref<8x128xf32, #tpu.memory_space<vmem>>, %arg2: memref<8x4xi32, #tpu.memory_space<vmem>>, %arg3: memref<1x1x128xf32, #tpu.memory_space<vmem>>) attributes {dimension_semantics = [#tpu.dimension_semantics<parallel>], iteration_bounds = array<i64: 2>, scalar_prefetch = 0 : i64, scratch_operands = 0 : i64, tpu.core_type = #tpu.core_type<tc>, window_params = [{transform_indices = @transform_0, window_bounds = array<i64: 8, 128>}, {transform_indices = @transform_1, window_bounds = array<i64: 8, 4>}, {transform_indices = @transform_2, window_bounds = array<i64: 1, 1, 128>}]} {
    %c0 = arith.constant 0 : index
    %c0_0 = arith.constant 0 : index
    %0 = vector.load %arg1[%c0, %c0_0] : memref<8x128xf32, #tpu.memory_space<vmem>>, vector<8x128xf32>
    %c8_i32 = arith.constant 8 : i32
    %1 = arith.muli %arg0, %c8_i32 : i32
    %2 = tpu.iota {dimensions = array<i32: 0>} : vector<8x4xi32>
    %3 = vector.broadcast %1 : i32 to vector<8x4xi32>
    %4 = arith.addi %2, %3 : vector<8x4xi32>
    %c0_1 = arith.constant 0 : index
    %c0_2 = arith.constant 0 : index
    %5 = vector.load %arg2[%c0_1, %c0_2] : memref<8x4xi32, #tpu.memory_space<vmem>>, vector<8x4xi32>
    %6 = tpu.iota {dimensions = array<i32: 1>} : vector<8x4xi32>
    %c32_i32 = arith.constant 32 : i32
    %7 = vector.broadcast %c32_i32 : i32 to vector<8x4xi32>
    %8 = arith.muli %6, %7 : vector<8x4xi32>
    %9 = arith.addi %5, %8 : vector<8x4xi32>
    %c16_i32 = arith.constant 16 : i32
    %10 = vector.broadcast %c16_i32 : i32 to vector<8x4xi32>
    %11 = arith.cmpi slt, %4, %10 : vector<8x4xi32>
    %c-1_i32 = arith.constant -1 : i32
    %12 = vector.broadcast %c-1_i32 : i32 to vector<8x4xi32>
    %13 = arith.select %11, %9, %12 : vector<8x4xi1>, vector<8x4xi32>
    %14 = tpu.iota {dimensions = array<i32: 1>} : vector<8x128xi32>
    %15 = vector.extract_strided_slice %13 {offsets = [0, 0], sizes = [8, 1], strides = [1, 1]} : vector<8x4xi32> to vector<8x1xi32>
    %16 = vector.broadcast %15 : vector<8x1xi32> to vector<8x128xi32>
    %17 = arith.cmpi eq, %14, %16 : vector<8x128xi32>
    %18 = vector.extract_strided_slice %13 {offsets = [0, 1], sizes = [8, 1], strides = [1, 1]} : vector<8x4xi32> to vector<8x1xi32>
    %19 = vector.broadcast %18 : vector<8x1xi32> to vector<8x128xi32>
    %20 = arith.cmpi eq, %14, %19 : vector<8x128xi32>
    %21 = arith.ori %17, %20 : vector<8x128xi1>
    %22 = vector.extract_strided_slice %13 {offsets = [0, 2], sizes = [8, 1], strides = [1, 1]} : vector<8x4xi32> to vector<8x1xi32>
    %23 = vector.broadcast %22 : vector<8x1xi32> to vector<8x128xi32>
    %24 = arith.cmpi eq, %14, %23 : vector<8x128xi32>
    %25 = arith.ori %21, %24 : vector<8x128xi1>
    %26 = vector.extract_strided_slice %13 {offsets = [0, 3], sizes = [8, 1], strides = [1, 1]} : vector<8x4xi32> to vector<8x1xi32>
    %27 = vector.broadcast %26 : vector<8x1xi32> to vector<8x128xi32>
    %28 = arith.cmpi eq, %14, %27 : vector<8x128xi32>
    %29 = arith.ori %25, %28 : vector<8x128xi1>
    %c0_i32 = arith.constant 0 : i32
    %30 = arith.sitofp %c0_i32 : i32 to f32
    %31 = vector.broadcast %30 : f32 to vector<8x128xf32>
    %32 = arith.select %29, %0, %31 : vector<8x128xi1>, vector<8x128xf32>
    %cst = arith.constant dense<0.000000e+00> : vector<128xf32>
    %33 = vector.multi_reduction <add>, %32, %cst [0] : vector<8x128xf32> to vector<128xf32>
    %34 = vector.shape_cast %33 : vector<128xf32> to vector<1x128xf32>
    %35 = vector.shape_cast %34 : vector<1x128xf32> to vector<1x1x128xf32>
    %c0_3 = arith.constant 0 : index
    %c0_4 = arith.constant 0 : index
    %c0_5 = arith.constant 0 : index
    %36 = vector.load %arg3[%c0_3, %c0_4, %c0_5] : memref<1x1x128xf32, #tpu.memory_space<vmem>>, vector<1x1x128xf32>
    tpu.vector_store %arg3[%c0_3, %c0_4, %c0_5], %35 {strides = array<i32>} : memref<1x1x128xf32, #tpu.memory_space<vmem>>, vector<1x1x128xf32>,
    return
  }
  func.func @transform_0(%arg0: i32) -> (i32, i32) {
    %c0_i32 = arith.constant 0 : i32
    %c0_i32_0 = arith.constant 0 : i32
    return %arg0, %c0_i32 : i32, i32
  }
  func.func @transform_1(%arg0: i32) -> (i32, i32) {
    %c0_i32 = arith.constant 0 : i32
    %c0_i32_0 = arith.constant 0 : i32
    return %arg0, %c0_i32 : i32, i32
  }
  func.func @transform_2(%arg0: i32) -> (i32, i32, i32) {
    %c0_i32 = arith.constant 0 : i32
    %c0_i32_0 = arith.constant 0 : i32
    %c0_i32_1 = arith.constant 0 : i32
    return %arg0, %c0_i32, %c0_i32_0 : i32, i32, i32
  }
}

</mosaic_0001>

<llo_original>
// kernel: tpu_custom_call.1
$region0: #{tpu_custom_call.1}
  #allocation0 [shape = 'u32[]', space=smem, size = 0x4, offset = 0x4, fixed_abs, tag = 'smem constant byte address 0x4 - core index']
  #allocation1 [shape = 'u32[144,128]{1,0:T(1,128)}', space=vmem, size = 0x12000, scoped, tag = 'internal scratch']
  %s0 = inlined_call_operand.vmem [shape: f32[16,128], index: 0, kind: input, shape index: {}]
  %s1 = inlined_call_operand.vmem [shape: s32[16,4], index: 1, kind: input, shape index: {}]
  %s2 = inlined_call_operand.hbm [shape: f32[2,1,128], index: 2, kind: output, shape index: {}]
  %s3 = sld [smem:[#allocation0]]
  $region41: #{tpu_custom_call.1} parent=0
    _
  %s5 = ssub.s32 1, %s3
  %s6 = scalar_select 0, %s5, %s3
  $region1: #{tpu_custom_call.1} parent=0
    #allocation2 [shape = 'u8[1024]{0}', space=vmem, size = 0x400, scoped, tag = 'output window, operand 0']
    #allocation3 [shape = 's32[2]{0}', space=sflag, size = 0x8, scoped, tag = 'scoped memory for tpu_custom_call.1']
    %7 = vsyncpa [#allocation3], 0
    %s8 = scalar_lea.sflag [#allocation3], 1
    %9 = vsyncpa %s8, 0
    loop: start=0, step=1, limit=4
    $region2: #{tpu_custom_call.1} parent=1 // loop_pre_header
      _
    $region3: #{tpu_custom_call.1} parent=1 // loop_header
      %s11 = sphi 0, %s15
      %p12 = scmp.ge.s32.totalorder %s11, 4
      %s21 = sphi 0, %s23
      %s24 = sphi 0, %s21
      %s25 = sphi 0, %s24
      %s41 = sphi 0, %s25
      %s47 = sphi 0, %s49
      %s50 = sphi 0, %s47
      %s51 = sphi 0, %s50
      %s67 = sphi 0, %s51
      %s73 = sphi 0, %s75
      %s76 = sphi 0, %s73
      %s77 = sphi 0, %s76
      %s93 = sphi 0, %s77
    $region4: #{tpu_custom_call.1} parent=1 // loop_header_branch
      %14 = sbr.rel (%p12) target = $region8
    $region5: #{tpu_custom_call.1} parent=1 // loop_body
      %s16 = ssub.s32 %s11, 1
      %s17 = ssub.s32 %s11, 2
      %s18 = sadd.s32 %s11, 1
      %s19 = ssub.s32 %s11, %s18
      %p20 = scmp.eq.s32.totalorder %s19, 0
      %s22 = sadd.s32 %s21, 1
      %s23 = scalar_select %p20, %s21, %s22
      %p26 = pneg %p20
      %p27 = scmp.eq.s32.totalorder %s11, 1
      %p28 = por %p26, %p27
      %p29 = scmp.ne.s32.totalorder %s21, %s24
      %p30 = scmp.eq.s32.totalorder %s11, 0
      %p31 = por %p29, %p30
      %p32 = scmp.ne.s32.totalorder %s21, %s24
      %p33 = scmp.eq.s32.totalorder %s16, 1
      %p34 = por %p32, %p33
      %p35 = scmp.ne.s32.totalorder %s24, %s25
      %p36 = scmp.eq.s32.totalorder %s16, 0
      %p37 = por %p35, %p36
      %p38 = scmp.ne.s32.totalorder %s24, %s25
      %p39 = scmp.eq.s32.totalorder %s17, 1
      %p40 = por %p38, %p39
      %p42 = scmp.ne.s32.totalorder %s25, %s41
      %p43 = scmp.eq.s32.totalorder %s17, 0
      %p44 = por %p42, %p43
      %s45 = ssub.s32 %s11, %s18
      %p46 = scmp.eq.s32.totalorder %s45, 0
      %s48 = sadd.s32 %s47, 1
      %s49 = scalar_select %p46, %s47, %s48
      %p52 = pneg %p46
      %p53 = scmp.eq.s32.totalorder %s11, 1
      %p54 = por %p52, %p53
      %p55 = scmp.ne.s32.totalorder %s47, %s50
      %p56 = scmp.eq.s32.totalorder %s11, 0
      %p57 = por %p55, %p56
      %p58 = scmp.ne.s32.totalorder %s47, %s50
      %p59 = scmp.eq.s32.totalorder %s16, 1
      %p60 = por %p58, %p59
      %p61 = scmp.ne.s32.totalorder %s50, %s51
      %p62 = scmp.eq.s32.totalorder %s16, 0
      %p63 = por %p61, %p62
      %p64 = scmp.ne.s32.totalorder %s50, %s51
      %p65 = scmp.eq.s32.totalorder %s17, 1
      %p66 = por %p64, %p65
      %p68 = scmp.ne.s32.totalorder %s51, %s67
      %p69 = scmp.eq.s32.totalorder %s17, 0
      %p70 = por %p68, %p69
      %s71 = ssub.s32 %s11, %s18
      %p72 = scmp.eq.s32.totalorder %s71, 0
      %s74 = sadd.s32 %s73, 1
      %s75 = scalar_select %p72, %s73, %s74
      %p78 = pneg %p72
      %p79 = scmp.eq.s32.totalorder %s11, 1
      %p80 = por %p78, %p79
      %p81 = scmp.ne.s32.totalorder %s73, %s76
      %p82 = scmp.eq.s32.totalorder %s11, 0
      %p83 = por %p81, %p82
      %p84 = scmp.ne.s32.totalorder %s73, %s76
      %p85 = scmp.eq.s32.totalorder %s16, 1
      %p86 = por %p84, %p85
      %p87 = scmp.ne.s32.totalorder %s76, %s77
      %p88 = scmp.eq.s32.totalorder %s16, 0
      %p89 = por %p87, %p88
      %p90 = scmp.ne.s32.totalorder %s76, %s77
      %p91 = scmp.eq.s32.totalorder %s17, 1
      %p92 = por %p90, %p91
      %p94 = scmp.ne.s32.totalorder %s77, %s93
      %p95 = scmp.eq.s32.totalorder %s17, 0
      %p96 = por %p94, %p95
      %p97 = scmp.le.s32.totalorder 1, %s11
      %p98 = scmp.lt.s32.totalorder %s11, 3
      %p99 = pnand %p97, %p98
      %p100 = pneg %p99
      // Predicated region
      $region9: #{tpu_custom_call.1} parent=5 // pred_check
        _
      $region10: #{tpu_custom_call.1} parent=5 // pred_check_branch
        %102 = sbr.rel (%p99) target = $region12
      $region11: #{tpu_custom_call.1} parent=5 // pred_region
        %s103 = ssub.s32 %s11, 1
      $region12: #{tpu_custom_call.1} parent=5 // pred_fallthru
        _
      %p104 = scmp.lt.s32.totalorder %s11, 2
      // Predicated region
      $region13: #{tpu_custom_call.1} parent=5 // pred_check
        %p105 = pneg %p104
      $region14: #{tpu_custom_call.1} parent=5 // pred_check_branch
        %107 = sbr.rel (%p105) target = $region16
      $region15: #{tpu_custom_call.1} parent=5 // pred_region
        // Predicated region
        $region17: #{tpu_custom_call.1} parent=15 // pred_check
          %p108 = pneg %p31
        $region18: #{tpu_custom_call.1} parent=15 // pred_check_branch
          %110 = sbr.rel (%p108) target = $region20
        $region19: #{tpu_custom_call.1} parent=15 // pred_region
          %p111 = scmp.lt.s32.totalorder %s11, 1
          %s112 = scalar_select %p111, %s11, 1
          %s113 = smul.addr %s112, 8
          %s114 = scalar_lea.vmem %s0, %s113
        $region20: #{tpu_custom_call.1} parent=15 // pred_fallthru
          _
        // Predicated region
        $region21: #{tpu_custom_call.1} parent=15 // pred_check
          %p115 = pneg %p57
        $region22: #{tpu_custom_call.1} parent=15 // pred_check_branch
          %117 = sbr.rel (%p115) target = $region24
        $region23: #{tpu_custom_call.1} parent=15 // pred_region
          %p118 = scmp.lt.s32.totalorder %s11, 1
          %s119 = scalar_select %p118, %s11, 1
          %s120 = smul.addr %s119, 8
          %s121 = scalar_lea.vmem %s1, %s120
        $region24: #{tpu_custom_call.1} parent=15 // pred_fallthru
          _
      $region16: #{tpu_custom_call.1} parent=5 // pred_fallthru
        _
      %p122 = scmp.le.s32.totalorder 1, %s11
      %p123 = scmp.lt.s32.totalorder %s11, 3
      %p124 = pnand %p122, %p123
      %p125 = pneg %p124
      // Predicated region
      $region25: #{tpu_custom_call.1} parent=5 // pred_check
        _
      $region26: #{tpu_custom_call.1} parent=5 // pred_check_branch
        %127 = sbr.rel (%p124) target = $region28
      $region27: #{tpu_custom_call.1} parent=5 // pred_region
        %s128 = ssub.s32 %s11, 1
        %p129 = scmp.lt.s32.totalorder %s16, 1
        %s130 = scalar_select %p129, %s16, 1
        %s131 = smul.addr %s130, 8
        %s132 = scalar_lea.vmem %s0, %s131
        %p133 = pneg %p37
        %p134 = pneg %p34
        %p135 = scmp.lt.s32.totalorder %s16, 1
        %s136 = scalar_select %p135, %s16, 1
        %s137 = smul.addr %s136, 8
        %s138 = scalar_lea.vmem %s1, %s137
        %p139 = pneg %p63
        %p140 = pneg %p60
        %p141 = pneg %p89
        %p142 = pneg %p86
        %s143 = sand.u32 %s76, 1
        %s144 = scalar_lea.sflag [#allocation3], %s143
        %s145 = sand.u32 %s76, 1
        %s146 = scalar_lea.vmem [#allocation2], %s145
        %p147 = scmp.lt.s32.totalorder %s16, 1
        %s148 = scalar_select %p147, %s16, 1
        %s149 = smul.addr %s148, 8
        %s150 = scalar_lea.vmem %s0, %s149
        %p151 = scmp.lt.s32.totalorder %s16, 1
        %s152 = scalar_select %p151, %s16, 1
        %s153 = smul.addr %s152, 8
        %s154 = scalar_lea.vmem %s1, %s153
        %v155 = vld [vmem:[%s150] sm:$0xff]
        %s156 = smul.u32 %s16, 8
        %v157 = vlaneseq
        %v158 = vshrl.u32 %v157, 7
        %v159 = vstv %s156
        %v160 = vadd.s32 %v158, %v159
        %v161 = vld [vmem:[%s154] sm:$0xff]
        %v162 = vlaneseq
        %v163 = vand.u32 %v162, 127
        %v164 = vmul.u32 %v163, 32
        %v165 = vadd.s32 %v161, %v164
        %vm166 = vcmp.lt.s32.totalorder %v160, 16
        %v167 = vsel %vm166, %v165, 4294967295
        %168 = vset.pattern.permute.xlu0 0
        %169 = vperm.xlu0 %168, %v167
        %v170 = vpop.permute.xlu0 %169
        %vm171 = vcmp.eq.s32.totalorder %v163, %v170
        %172 = vset.pattern.permute.xlu0 1
        %173 = vperm.xlu0 %172, %v167
        %v174 = vpop.permute.xlu0 %173
        %vm175 = vcmp.eq.s32.totalorder %v163, %v174
        %vm176 = vmor %vm171, %vm175
        %177 = vset.pattern.permute.xlu0 2
        %178 = vperm.xlu0 %177, %v167
        %v179 = vpop.permute.xlu0 %178
        %vm180 = vcmp.eq.s32.totalorder %v163, %v179
        %vm181 = vmor %vm176, %vm180
        %182 = vset.pattern.permute.xlu0 3
        %183 = vperm.xlu0 %182, %v167
        %v184 = vpop.permute.xlu0 %183
        %vm185 = vcmp.eq.s32.totalorder %v163, %v184
        %vm186 = vmor %vm181, %vm185
        %v187 = vsel %vm186, %v155, 0.0
        %v188 = vrot.slane %v187, 4
        %v189 = vadd.f32 %v187, %v188
        %v190 = vrot.slane %v189, 2
        %v191 = vadd.f32 %v189, %v190
        %v192 = vrot.slane %v191, 1
        %v193 = vadd.f32 %v191, %v192
        %194 = vst [vmem:[%s146] sm:$0x1] %v193
        %s195 = sand.u32 %s76, 1
        %s196 = scalar_lea.sflag [#allocation3], %s195
        %s197 = sand.u32 %s76, 1
        %s198 = scalar_lea.vmem [#allocation2], %s197
        // Predicated region
        $region29: #{tpu_custom_call.1} parent=27 // pred_check
          %p199 = pneg %p86
        $region30: #{tpu_custom_call.1} parent=27 // pred_check_branch
          %201 = sbr.rel (%p199) target = $region32
        $region31: #{tpu_custom_call.1} parent=27 // pred_region
          %s203 = ssub.s32 16, 16
          %204 = vsyncadd %s196, %s203
          %s205 = smul.addr %s16, 16
          %s206 = scalar_lea.hbm %s2, %s205
          %s208 = sshll.u32 %s198, 4
          %s209 = int_to_ptr.vmem [resolvable:$true] %s208
          %211 = dma.vmem_to_hbm [thread:$0]  %s209, 16, %s206, %s196
        $region32: #{tpu_custom_call.1} parent=27 // pred_fallthru
          _
      $region28: #{tpu_custom_call.1} parent=5 // pred_fallthru
        _
      %p212 = scmp.le.s32.totalorder 2, %s11
      // Predicated region
      $region33: #{tpu_custom_call.1} parent=5 // pred_check
        %p213 = pneg %p212
      $region34: #{tpu_custom_call.1} parent=5 // pred_check_branch
        %215 = sbr.rel (%p213) target = $region36
      $region35: #{tpu_custom_call.1} parent=5 // pred_region
        %s216 = ssub.s32 %s11, 2
        // Predicated region
        $region37: #{tpu_custom_call.1} parent=35 // pred_check
          %p217 = pneg %p92
        $region38: #{tpu_custom_call.1} parent=35 // pred_check_branch
          %219 = sbr.rel (%p217) target = $region40
        $region39: #{tpu_custom_call.1} parent=35 // pred_region
          %s220 = sand.u32 %s77, 1
          %s221 = scalar_lea.sflag [#allocation3], %s220
          %s222 = sand.u32 %s77, 1
          %s223 = scalar_lea.vmem [#allocation2], %s222
          %224 = dma.done %s221, 16
        $region40: #{tpu_custom_call.1} parent=35 // pred_fallthru
          _
      $region36: #{tpu_custom_call.1} parent=5 // pred_fallthru
        _
    $region6: #{tpu_custom_call.1} parent=1 // loop_footer
      %s15 = sadd.s32 1, %s11
    $region7: #{tpu_custom_call.1} parent=1 // loop_footer_branch
      %10 = sbr.rel target = $region3
    $region8: #{tpu_custom_call.1} parent=1 // loop_exit
      _
    %225 = vsyncpa [#allocation3], 1
    %s226 = scalar_lea.sflag [#allocation3], 1
    %227 = vsyncpa %s226, 1

</llo_original>
